<compile_context>
chip_gen: v7x
topology: tpu7x:2x2x1
jax: 0.10.0
libtpu: 0.0.40
codegen_flags: <defaults>
</compile_context>

<pallas_src>
import jax
import jax.numpy as jnp
from jax.experimental import pallas as pl
from jax.experimental.pallas import tpu as pltpu


def _round_up(x: int, m: int) -> int:
    return ((x + m - 1) // m) * m


def _mlp_kernel(x_ref, w1_ref, b1_ref, w2_ref, b2_ref, o_ref):
    # Linear 1 + ReLU: bf16 x/w on the MXU, f32 accumulate, f32 bias/ReLU.
    h = jnp.dot(x_ref[...], w1_ref[...], preferred_element_type=jnp.float32)
    h = jnp.maximum(h + b1_ref[...], 0.0)          # (TM, Hp) + (1, Hp), f32

    # Linear 2 + ReLU: cast activations back to bf16 for the MXU, f32 acc.
    o = jnp.dot(h.astype(w2_ref.dtype), w2_ref[...],
                preferred_element_type=jnp.float32)
    o = jnp.maximum(o + b2_ref[...], 0.0)          # (TM, Op) + (1, Op), f32

    o_ref[...] = o.astype(o_ref.dtype)


def _pick_tm(batch: int) -> int:
    # Tiny batch: one block whose dims equal the full array dims (always legal).
    if batch <= 16:
        return batch
    # Otherwise: at least 2 grid steps (v7x dual-TC sharding), rows a multiple
    # of 8, capped at 512 rows (x double-buffer stays a few MiB at d_in=784).
    return min(512, _round_up(pl.cdiv(batch, 2), 8))


def _vmem_limit_bytes(tm, d_in, hid_p, d_out_p):
    bf16, f32 = 2, 4
    x_bufs = 2 * tm * d_in * bf16            # double-buffered activation tiles
    o_bufs = 2 * tm * d_out_p * f32          # double-buffered output tiles
    weights = (d_in * hid_p + hid_p * d_out_p) * bf16 + (hid_p + d_out_p) * f32
    est = x_bufs + o_bufs + weights + (8 << 20)
    # Keep comfortably inside the smallest physical VMEM (v7x: 64 MiB/TC).
    return int(min(max(est, 16 << 20), 48 << 20))


def fashion_mnist_model2(x_nchw, w1, b1, w2, b2, *, tm=None):
    """Forward pass of FashionMNISTmodel2.

    x_nchw : (B, C, H, W)
    w1     : (input_shape, hidden_units)   b1 : (hidden_units,)
    w2     : (hidden_units, output_shape)  b2 : (output_shape,)
    returns (B, output_shape) float32
    """
    B = x_nchw.shape[0]
    d_in, hidden = w1.shape
    d_out = w2.shape[1]

    # Pad only the small dims (hidden, output) to lane-friendly 128 multiples.
    # Padding is mathematically inert: zero weight cols -> ReLU(0+0)=0 hidden
    # cols -> zero contribution through zero w2 rows; padded output lanes are
    # sliced off below.
    hid_p = _round_up(hidden, 128)
    d_out_p = _round_up(d_out, 128)

    if tm is None:
        tm = _pick_tm(B)

    # nn.Flatten(): (B, C, H, W) -> (B, C*H*W), row-major (matches torch).
    # Cast to bf16 in the wrapper (halves the dominant HBM stream); no pad of x.
    x2d = x_nchw.reshape(B, -1)
    assert x2d.shape[1] == d_in
    if x2d.dtype != jnp.bfloat16:
        x2d = x2d.astype(jnp.bfloat16)

    w1p = jnp.pad(w1.astype(jnp.bfloat16), ((0, 0), (0, hid_p - hidden)))
    b1p = jnp.pad(b1.astype(jnp.float32), (0, hid_p - hidden)).reshape(1, hid_p)
    w2p = jnp.pad(w2.astype(jnp.bfloat16),
                  ((0, hid_p - hidden), (0, d_out_p - d_out)))
    b2p = jnp.pad(b2.astype(jnp.float32), (0, d_out_p - d_out)).reshape(1, d_out_p)

    grid = (pl.cdiv(B, tm),)   # ragged last block OK: garbage rows sliced off

    out = pl.pallas_call(
        _mlp_kernel,
        out_shape=jax.ShapeDtypeStruct((B, d_out_p), jnp.float32),
        grid=grid,
        in_specs=[
            # Activations: stream batch tiles; last dim = full array dim
            # (no K padding needed).
            pl.BlockSpec((tm, d_in), lambda i: (i, 0)),
            # Weights/biases: constant index_map -> VMEM-resident across tiles.
            pl.BlockSpec((d_in, hid_p), lambda i: (0, 0)),
            pl.BlockSpec((1, hid_p), lambda i: (0, 0)),
            pl.BlockSpec((hid_p, d_out_p), lambda i: (0, 0)),
            pl.BlockSpec((1, d_out_p), lambda i: (0, 0)),
        ],
        out_specs=pl.BlockSpec((tm, d_out_p), lambda i: (i, 0)),
        compiler_params=pltpu.CompilerParams(
            dimension_semantics=("parallel",),  # batch tiles are independent
            vmem_limit_bytes=_vmem_limit_bytes(tm, d_in, hid_p, d_out_p),
        ),
    )(x2d, w1p, b1p, w2p, b2p)

    # Strip output-lane padding (batch is already exact: out_shape uses B).
    return out[:, :d_out]


def _reference(x_nchw, w1, b1, w2, b2):
    x = x_nchw.reshape(x_nchw.shape[0], -1)
    h = jnp.maximum(x @ w1 + b1, 0.0)
    return jnp.maximum(h @ w2 + b2, 0.0)


if __name__ == "__main__":
    # Shapes consistent with the module's forward:
    # batch=2, channels=1, spatial=16x16 -> input_shape=256, hidden=32, output=10
    B, C, H, W = 2, 1, 16, 16
    input_shape = C * H * W
    hidden_units = 32
    output_shape = 10

    key = jax.random.PRNGKey(0)
    kx, kw1, kb1, kw2, kb2 = jax.random.split(key, 5)

    x = jax.random.normal(kx, (B, C, H, W), dtype=jnp.float32)
    lim1 = 1.0 / (input_shape ** 0.5)
    lim2 = 1.0 / (hidden_units ** 0.5)
    w1 = jax.random.uniform(kw1, (input_shape, hidden_units),
                            minval=-lim1, maxval=lim1, dtype=jnp.float32)
    b1 = jax.random.uniform(kb1, (hidden_units,),
                            minval=-lim1, maxval=lim1, dtype=jnp.float32)
    w2 = jax.random.uniform(kw2, (hidden_units, output_shape),
                            minval=-lim2, maxval=lim2, dtype=jnp.float32)
    b2 = jax.random.uniform(kb2, (output_shape,),
                            minval=-lim2, maxval=lim2, dtype=jnp.float32)

    # bf16 activations/weights vs f32 reference: loosened tolerance.
    TOL = 2e-2

    # Small-batch case (single full-array block).
    out = jax.block_until_ready(fashion_mnist_model2(x, w1, b1, w2, b2))
    ref = _reference(x, w1, b1, w2, b2)
    assert out.shape == (B, output_shape)
    assert jnp.allclose(out, ref, atol=TOL, rtol=TOL), "mismatch vs reference (B=2)"

    # Multi-tile case: exercises the batch grid with a ragged last block
    # (B=40, tm=16 -> grid=(3,), last block has 8 real + 8 garbage rows).
    B2 = 40
    x_big = jax.random.normal(jax.random.PRNGKey(1), (B2, C, H, W), dtype=jnp.float32)
    out_big = jax.block_until_ready(
        fashion_mnist_model2(x_big, w1, b1, w2, b2, tm=16))
    ref_big = _reference(x_big, w1, b1, w2, b2)
    assert out_big.shape == (B2, output_shape)
    assert jnp.allclose(out_big, ref_big, atol=TOL, rtol=TOL), "mismatch vs reference (B=40)"

    # Default tm heuristic on a mid-size batch (>=2 grid steps for v7x).
    B3 = 300
    x_mid = jax.random.normal(jax.random.PRNGKey(2), (B3, C, H, W), dtype=jnp.float32)
    out_mid = jax.block_until_ready(fashion_mnist_model2(x_mid, w1, b1, w2, b2))
    ref_mid = _reference(x_mid, w1, b1, w2, b2)
    assert out_mid.shape == (B3, output_shape)
    assert jnp.allclose(out_mid, ref_mid, atol=TOL, rtol=TOL), "mismatch vs reference (B=300)"

    print("KERNEL_OK")
</pallas_src>

<mosaic_0001>
module attributes {stable_mosaic.version = 11 : i64} {
  func.func @_mlp_kernel(%arg0: i32, %arg1: memref<2x256xbf16, #tpu.memory_space<vmem>>, %arg2: memref<256x128xbf16, #tpu.memory_space<vmem>>, %arg3: memref<1x128xf32, #tpu.memory_space<vmem>>, %arg4: memref<128x128xbf16, #tpu.memory_space<vmem>>, %arg5: memref<1x128xf32, #tpu.memory_space<vmem>>, %arg6: memref<2x128xf32, #tpu.memory_space<vmem>>) attributes {dimension_semantics = [#tpu.dimension_semantics<parallel>], iteration_bounds = array<i64: 1>, scalar_prefetch = 0 : i64, scratch_operands = 0 : i64, tpu.core_type = #tpu.core_type<tc>, window_params = [{transform_indices = @transform_0, window_bounds = array<i64: 2, 256>}, {pipeline_mode = #tpu.pipeline_mode<synchronous>, transform_indices = @transform_1, window_bounds = array<i64: 256, 128>}, {pipeline_mode = #tpu.pipeline_mode<synchronous>, transform_indices = @transform_2, window_bounds = array<i64: 1, 128>}, {pipeline_mode = #tpu.pipeline_mode<synchronous>, transform_indices = @transform_3, window_bounds = array<i64: 128, 128>}, {pipeline_mode = #tpu.pipeline_mode<synchronous>, transform_indices = @transform_4, window_bounds = array<i64: 1, 128>}, {transform_indices = @transform_5, window_bounds = array<i64: 2, 128>}]} {
    %c0 = arith.constant 0 : index
    %c0_0 = arith.constant 0 : index
    %0 = vector.load %arg1[%c0, %c0_0] : memref<2x256xbf16, #tpu.memory_space<vmem>>, vector<2x256xbf16>
    %c0_1 = arith.constant 0 : index
    %c0_2 = arith.constant 0 : index
    %1 = vector.load %arg2[%c0_1, %c0_2] : memref<256x128xbf16, #tpu.memory_space<vmem>>, vector<256x128xbf16>
    %cst = arith.constant dense<0.000000e+00> : vector<2x128xf32>
    %2 = tpu.matmul %0, %1, %cst {dimension_numbers = #tpu.dot_dimension_numbers<[1], [0], [0], [1], [0, 0, 1, 1], [], []>} : vector<2x256xbf16>, vector<256x128xbf16>, vector<2x128xf32> -> vector<2x128xf32>
    %c0_3 = arith.constant 0 : index
    %c0_4 = arith.constant 0 : index
    %3 = vector.load %arg3[%c0_3, %c0_4] : memref<1x128xf32, #tpu.memory_space<vmem>>, vector<1x128xf32>
    %4 = vector.broadcast %3 : vector<1x128xf32> to vector<2x128xf32>
    %5 = arith.addf %2, %4 : vector<2x128xf32>
    %cst_5 = arith.constant 0.000000e+00 : f32
    %6 = vector.broadcast %cst_5 : f32 to vector<2x128xf32>
    %7 = arith.maximumf %5, %6 : vector<2x128xf32>
    %8 = arith.truncf %7 : vector<2x128xf32> to vector<2x128xbf16>
    %c0_6 = arith.constant 0 : index
    %c0_7 = arith.constant 0 : index
    %9 = vector.load %arg4[%c0_6, %c0_7] : memref<128x128xbf16, #tpu.memory_space<vmem>>, vector<128x128xbf16>
    %cst_8 = arith.constant dense<0.000000e+00> : vector<2x128xf32>
    %10 = tpu.matmul %8, %9, %cst_8 {dimension_numbers = #tpu.dot_dimension_numbers<[1], [0], [0], [1], [0, 0, 1, 1], [], []>} : vector<2x128xbf16>, vector<128x128xbf16>, vector<2x128xf32> -> vector<2x128xf32>
    %c0_9 = arith.constant 0 : index
    %c0_10 = arith.constant 0 : index
    %11 = vector.load %arg5[%c0_9, %c0_10] : memref<1x128xf32, #tpu.memory_space<vmem>>, vector<1x128xf32>
    %12 = vector.broadcast %11 : vector<1x128xf32> to vector<2x128xf32>
    %13 = arith.addf %10, %12 : vector<2x128xf32>
    %cst_11 = arith.constant 0.000000e+00 : f32
    %14 = vector.broadcast %cst_11 : f32 to vector<2x128xf32>
    %15 = arith.maximumf %13, %14 : vector<2x128xf32>
    %c0_12 = arith.constant 0 : index
    %c0_13 = arith.constant 0 : index
    %16 = vector.load %arg6[%c0_12, %c0_13] : memref<2x128xf32, #tpu.memory_space<vmem>>, vector<2x128xf32>
    tpu.vector_store %arg6[%c0_12, %c0_13], %15 {strides = array<i32>} : memref<2x128xf32, #tpu.memory_space<vmem>>, vector<2x128xf32>,
    return
  }
  func.func @transform_0(%arg0: i32) -> (i32, i32) {
    %c0_i32 = arith.constant 0 : i32
    %c0_i32_0 = arith.constant 0 : i32
    return %arg0, %c0_i32 : i32, i32
  }
  func.func @transform_1(%arg0: i32) -> (i32, i32) {
    %c0_i32 = arith.constant 0 : i32
    %c0_i32_0 = arith.constant 0 : i32
    %c0_i32_1 = arith.constant 0 : i32
    return %c0_i32, %c0_i32_0 : i32, i32
  }
  func.func @transform_2(%arg0: i32) -> (i32, i32) {
    %c0_i32 = arith.constant 0 : i32
    %c0_i32_0 = arith.constant 0 : i32
    %c0_i32_1 = arith.constant 0 : i32
    return %c0_i32, %c0_i32_0 : i32, i32
  }
  func.func @transform_3(%arg0: i32) -> (i32, i32) {
    %c0_i32 = arith.constant 0 : i32
    %c0_i32_0 = arith.constant 0 : i32
    %c0_i32_1 = arith.constant 0 : i32
    return %c0_i32, %c0_i32_0 : i32, i32
  }
  func.func @transform_4(%arg0: i32) -> (i32, i32) {
    %c0_i32 = arith.constant 0 : i32
    %c0_i32_0 = arith.constant 0 : i32
    %c0_i32_1 = arith.constant 0 : i32
    return %c0_i32, %c0_i32_0 : i32, i32
  }
  func.func @transform_5(%arg0: i32) -> (i32, i32) {
    %c0_i32 = arith.constant 0 : i32
    %c0_i32_0 = arith.constant 0 : i32
    return %arg0, %c0_i32 : i32, i32
  }
}

</mosaic_0001>

<llo_original>
// kernel: tpu_custom_call.1
$region0: #{tpu_custom_call.1}
  #allocation0 [shape = 'u32[]', space=smem, size = 0x4, offset = 0x4, fixed_abs, tag = 'smem constant byte address 0x4 - core index']
  #allocation1 [shape = 'u32[144,128]{1,0:T(1,128)}', space=vmem, size = 0x12000, scoped, tag = 'internal scratch']
  %s0 = inlined_call_operand.hbm [shape: bf16[2,256], index: 0, kind: input, shape index: {}]
  %s1 = inlined_call_operand.hbm [shape: bf16[256,128], index: 1, kind: input, shape index: {}]
  %s2 = inlined_call_operand.vmem [shape: f32[1,128], index: 2, kind: input, shape index: {}]
  %s3 = inlined_call_operand.hbm [shape: bf16[128,128], index: 3, kind: input, shape index: {}]
  %s4 = inlined_call_operand.vmem [shape: f32[1,128], index: 4, kind: input, shape index: {}]
  %s5 = inlined_call_operand.hbm [shape: f32[2,128], index: 5, kind: output, shape index: {}]
  %s6 = sld [smem:[#allocation0]]
  $region42: #{tpu_custom_call.1} parent=0
    _
  %s8 = ssub.s32 1, %s6
  %s9 = scalar_select 0, %s8, %s6
  $region1: #{tpu_custom_call.1} parent=0
    #allocation2 [shape = 'u8[1024]{0}', space=vmem, size = 0x400, scoped, tag = 'input window, operand 0, single buffered']
    #allocation3 [shape = 's32[1]{0}', space=sflag, size = 0x4, scoped, tag = 'scoped memory for tpu_custom_call.1']
    #allocation4 [shape = 's32[1]{0}', space=sflag, size = 0x4, scoped, tag = 'scoped memory for tpu_custom_call.1']
    #allocation5 [shape = 'u8[65536]{0}', space=vmem, size = 0x10000, scoped, tag = 'input window, operand 1, single buffered']
    #allocation6 [shape = 's32[1]{0}', space=sflag, size = 0x4, scoped, tag = 'scoped memory for tpu_custom_call.1']
    #allocation7 [shape = 'u8[32768]{0}', space=vmem, size = 0x8000, scoped, tag = 'input window, operand 3, single buffered']
    #allocation8 [shape = 'u8[1024]{0}', space=vmem, size = 0x400, scoped, tag = 'output window, operand 0, single buffered']
    %10 = vsyncpa [#allocation3], 0
    %11 = vsyncpa [#allocation6], 0
    %12 = vsyncpa [#allocation4], 0
    // Predicated region
    $region2: #{tpu_custom_call.1} parent=1 // pred_check
      _
    $region3: #{tpu_custom_call.1} parent=1 // pred_check_branch
      %14 = sbr.rel (0) target = $region5
    $region4: #{tpu_custom_call.1} parent=1 // pred_region
      %s16 = ssub.s32 32, 32
      %17 = vsyncadd [#allocation3], %s16
      %s19 = sshll.u32 [#allocation2], 4
      %s20 = int_to_ptr.vmem [resolvable:$true] %s19
      %22 = dma.hbm_to_vmem [thread:$0]  %s0, 32, %s20, [#allocation3]
    $region5: #{tpu_custom_call.1} parent=1 // pred_fallthru
      _
    // Predicated region
    $region6: #{tpu_custom_call.1} parent=1 // pred_check
      _
    $region7: #{tpu_custom_call.1} parent=1 // pred_check_branch
      %24 = sbr.rel (0) target = $region9
    $region8: #{tpu_custom_call.1} parent=1 // pred_region
      %s26 = ssub.s32 2048, 2048
      %27 = vsyncadd [#allocation6], %s26
      %s28 = sshll.u32 [#allocation5], 4
      %s29 = int_to_ptr.vmem [resolvable:$true] %s28
      %34 = dma.hbm_to_vmem [thread:$0]  %s1, 2048, %s29, [#allocation6], 64, 64, 4
    $region9: #{tpu_custom_call.1} parent=1 // pred_fallthru
      _
    // Predicated region
    $region10: #{tpu_custom_call.1} parent=1 // pred_check
      _
    $region11: #{tpu_custom_call.1} parent=1 // pred_check_branch
      %36 = sbr.rel (0) target = $region13
    $region12: #{tpu_custom_call.1} parent=1 // pred_region
      _
    $region13: #{tpu_custom_call.1} parent=1 // pred_fallthru
      _
    // Predicated region
    $region14: #{tpu_custom_call.1} parent=1 // pred_check
      _
    $region15: #{tpu_custom_call.1} parent=1 // pred_check_branch
      %38 = sbr.rel (0) target = $region17
    $region16: #{tpu_custom_call.1} parent=1 // pred_region
      %s40 = ssub.s32 1024, 1024
      %41 = vsyncadd [#allocation6], %s40
      %s42 = sshll.u32 [#allocation7], 4
      %s43 = int_to_ptr.vmem [resolvable:$true] %s42
      %48 = dma.hbm_to_vmem [thread:$0]  %s3, 1024, %s43, [#allocation6], 64, 64, 4
    $region17: #{tpu_custom_call.1} parent=1 // pred_fallthru
      _
    // Predicated region
    $region18: #{tpu_custom_call.1} parent=1 // pred_check
      _
    $region19: #{tpu_custom_call.1} parent=1 // pred_check_branch
      %50 = sbr.rel (0) target = $region21
    $region20: #{tpu_custom_call.1} parent=1 // pred_region
      _
    $region21: #{tpu_custom_call.1} parent=1 // pred_fallthru
      _
    // Predicated region
    $region22: #{tpu_custom_call.1} parent=1 // pred_check
      _
    $region23: #{tpu_custom_call.1} parent=1 // pred_check_branch
      %52 = sbr.rel (0) target = $region25
    $region24: #{tpu_custom_call.1} parent=1 // pred_region
      %53 = dma.done [#allocation3], 32
    $region25: #{tpu_custom_call.1} parent=1 // pred_fallthru
      _
    // Predicated region
    $region26: #{tpu_custom_call.1} parent=1 // pred_check
      _
    $region27: #{tpu_custom_call.1} parent=1 // pred_check_branch
      %55 = sbr.rel (0) target = $region29
    $region28: #{tpu_custom_call.1} parent=1 // pred_region
      %56 = dma.done [#allocation6], 2048
    $region29: #{tpu_custom_call.1} parent=1 // pred_fallthru
      _
    // Predicated region
    $region30: #{tpu_custom_call.1} parent=1 // pred_check
      _
    $region31: #{tpu_custom_call.1} parent=1 // pred_check_branch
      %58 = sbr.rel (0) target = $region33
    $region32: #{tpu_custom_call.1} parent=1 // pred_region
      %59 = dma.done [#allocation6], 1024
    $region33: #{tpu_custom_call.1} parent=1 // pred_fallthru
      _
    %v61 = vld [vmem:[#allocation2] sm:$0x3]
    %v62 = vld [vmem:[#allocation5] sm:$0xf]
    %v63 = vld [vmem:[#allocation5 + $0x4] sm:$0xf]
    %v64 = vld [vmem:[#allocation5 + $0x8] sm:$0xf]
    %v65 = vld [vmem:[#allocation5 + $0xc] sm:$0xf]
    %v66 = vld [vmem:[#allocation5 + $0x10] sm:$0xf]
    %v67 = vld [vmem:[#allocation5 + $0x14] sm:$0xf]
    %v68 = vld [vmem:[#allocation5 + $0x18] sm:$0xf]
    %v69 = vld [vmem:[#allocation5 + $0x1c] sm:$0xf]
    %v70 = vld [vmem:[#allocation5 + $0x20] sm:$0xf]
    %v71 = vld [vmem:[#allocation5 + $0x24] sm:$0xf]
    %v72 = vld [vmem:[#allocation5 + $0x28] sm:$0xf]
    %v73 = vld [vmem:[#allocation5 + $0x2c] sm:$0xf]
    %v74 = vld [vmem:[#allocation5 + $0x30] sm:$0xf]
    %v75 = vld [vmem:[#allocation5 + $0x34] sm:$0xf]
    %v76 = vld [vmem:[#allocation5 + $0x38] sm:$0xf]
    %v77 = vld [vmem:[#allocation5 + $0x3c] sm:$0xf]
    %v78 = vld [vmem:[#allocation5 + $0x40] sm:$0xf]
    %v79 = vld [vmem:[#allocation5 + $0x44] sm:$0xf]
    %v80 = vld [vmem:[#allocation5 + $0x48] sm:$0xf]
    %v81 = vld [vmem:[#allocation5 + $0x4c] sm:$0xf]
    %v82 = vld [vmem:[#allocation5 + $0x50] sm:$0xf]
    %v83 = vld [vmem:[#allocation5 + $0x54] sm:$0xf]
    %v84 = vld [vmem:[#allocation5 + $0x58] sm:$0xf]
    %v85 = vld [vmem:[#allocation5 + $0x5c] sm:$0xf]
    %v86 = vld [vmem:[#allocation5 + $0x60] sm:$0xf]
    %v87 = vld [vmem:[#allocation5 + $0x64] sm:$0xf]
    %v88 = vld [vmem:[#allocation5 + $0x68] sm:$0xf]
    %v89 = vld [vmem:[#allocation5 + $0x6c] sm:$0xf]
    %v90 = vld [vmem:[#allocation5 + $0x70] sm:$0xf]
    %v91 = vld [vmem:[#allocation5 + $0x74] sm:$0xf]
    %v92 = vld [vmem:[#allocation5 + $0x78] sm:$0xf]
    %v93 = vld [vmem:[#allocation5 + $0x7c] sm:$0xf]
    %v94 = vld [vmem:[%s2] sm:$0x1]
    %v96 = vlaneseq
    %v97 = vshrl.u32 %v96, 7
    %v98 = vsub.s32 0, %v97
    %v99 = vrot.slane %v94, %v98
    %v103 = vunpack.c.l.s4 1966171168
    %v104 = vunpack.c.0.s8 %v103
    %v105 = vlaneseq
    %v106 = vshrl.u32 %v105, 7
    %v107 = vsub.s32 %v104, %v106
    %v108 = vrot.slane %v61, %v107
    %v109 = vcombine.high %v108, %v108
    %v111 = vunpack.c.l.s4 1966171168
    %v112 = vunpack.c.0.s8 %v111
    %v113 = vlaneseq
    %v114 = vshrl.u32 %v113, 7
    %v115 = vsub.s32 %v112, %v114
    %v116 = vrot.slane %v108, %v115
    %v118 = vunpack.c.l.s4 1966171168
    %v119 = vunpack.c.0.s8 %v118
    %v120 = vlaneseq
    %v121 = vshrl.u32 %v120, 7
    %v122 = vsub.s32 %v119, %v121
    %v123 = vrot.slane %v109, %v122
    %v158 = vunpack.c.l.b16 %v62
    %v159 = vunpack.c.l.b16 %v63
    %v160 = vunpack.c.l.b16 %v64
    %v161 = vunpack.c.l.b16 %v65
    %v162 = vunpack.c.l.b16 %v66
    %v163 = vunpack.c.l.b16 %v67
    %v164 = vunpack.c.l.b16 %v68
    %v165 = vunpack.c.l.b16 %v69
    %v166 = vunpack.c.l.b16 %v70
    %v167 = vunpack.c.l.b16 %v71
    %v168 = vunpack.c.l.b16 %v72
    %v169 = vunpack.c.l.b16 %v73
    %v170 = vunpack.c.l.b16 %v74
    %v171 = vunpack.c.l.b16 %v75
    %v172 = vunpack.c.l.b16 %v76
    %v173 = vunpack.c.l.b16 %v77
    %v174 = vunpack.c.l.b16 %v78
    %v175 = vunpack.c.l.b16 %v79
    %v176 = vunpack.c.l.b16 %v80
    %v177 = vunpack.c.l.b16 %v81
    %v178 = vunpack.c.l.b16 %v82
    %v179 = vunpack.c.l.b16 %v83
    %v180 = vunpack.c.l.b16 %v84
    %v181 = vunpack.c.l.b16 %v85
    %v182 = vunpack.c.l.b16 %v86
    %v183 = vunpack.c.l.b16 %v87
    %v184 = vunpack.c.l.b16 %v88
    %v185 = vunpack.c.l.b16 %v89
    %v186 = vunpack.c.l.b16 %v90
    %v187 = vunpack.c.l.b16 %v91
    %v188 = vunpack.c.l.b16 %v92
    %v189 = vunpack.c.l.b16 %v93
    %v190 = vpack.c.b16 %v159, %v158
    %v191 = vpack.c.b16 %v161, %v160
    %v192 = vpack.c.b16 %v163, %v162
    %v193 = vpack.c.b16 %v165, %v164
    %v194 = vpack.c.b16 %v167, %v166
    %v195 = vpack.c.b16 %v169, %v168
    %v196 = vpack.c.b16 %v171, %v170
    %v197 = vpack.c.b16 %v173, %v172
    %v198 = vpack.c.b16 %v175, %v174
    %v199 = vpack.c.b16 %v177, %v176
    %v200 = vpack.c.b16 %v179, %v178
    %v201 = vpack.c.b16 %v181, %v180
    %v202 = vpack.c.b16 %v183, %v182
    %v203 = vpack.c.b16 %v185, %v184
    %v204 = vpack.c.b16 %v187, %v186
    %v205 = vpack.c.b16 %v189, %v188
    %222 = vmatprep.subr.bf16.mxu0 0
    %223 = vmatpush1.bf16.msra.mxu0 %v190
    %224 = vmatprep.subr.bf16.mxu0 0
    %225 = vmatpush1.bf16.msra.mxu0 %v191
    %226 = vmatprep.subr.bf16.mxu0 0
    %227 = vmatpush1.bf16.msra.mxu0 %v192
    %228 = vmatprep.subr.bf16.mxu0 0
    %229 = vmatpush1.bf16.msra.mxu0 %v193
    %230 = vmatprep.subr.bf16.mxu0 0
    %231 = vmatpush1.bf16.msra.mxu0 %v194
    %232 = vmatprep.subr.bf16.mxu0 0
    %233 = vmatpush1.bf16.msra.mxu0 %v195
    %234 = vmatprep.subr.bf16.mxu0 0
    %235 = vmatpush1.bf16.msra.mxu0 %v196
    %236 = vmatprep.subr.bf16.mxu0 0
    %237 = vmatpush1.bf16.msra.mxu0 %v197
    %238 = vmatprep.subr.bf16.mxu0 0
    %239 = vmatpush1.bf16.msra.mxu0 %v198
    %240 = vmatprep.subr.bf16.mxu0 0
    %241 = vmatpush1.bf16.msra.mxu0 %v199
    %242 = vmatprep.subr.bf16.mxu0 0
    %243 = vmatpush1.bf16.msra.mxu0 %v200
    %244 = vmatprep.subr.bf16.mxu0 0
    %245 = vmatpush1.bf16.msra.mxu0 %v201
    %246 = vmatprep.subr.bf16.mxu0 0
    %247 = vmatpush1.bf16.msra.mxu0 %v202
    %248 = vmatprep.subr.bf16.mxu0 0
    %249 = vmatpush1.bf16.msra.mxu0 %v203
    %250 = vmatprep.subr.bf16.mxu0 0
    %251 = vmatpush1.bf16.msra.mxu0 %v204
    %252 = vmatprep.subr.bf16.mxu0 0
    %253 = vmatpush1.bf16.msra.mxu0 %v205
    %254 = vmatprep.mubr.bf16.mxu0 %v123
    %255 = vmatmul.mubr.bf16.gmra.mrb[0].mxu0 %v116
    %v256 = vpop.f32.mrb[0].mxu0
    %v257 = vadd.f32 %v99, %v256
    %v258 = vpop.f32.mrb[0].mxu0
    %v259 = vpop.f32.mrb[0].mxu0
    %v260 = vpop.f32.mrb[0].mxu0
    %261 = vdwg.mxu0
    %v262 = vmax.f32 %v257, 0.0
    %v263 = vpack.c.bf16 %v262, %v262
    %v264 = vld [vmem:[#allocation7] sm:$0xf]
    %v265 = vld [vmem:[#allocation7 + $0x4] sm:$0xf]
    %v266 = vld [vmem:[#allocation7 + $0x8] sm:$0xf]
    %v267 = vld [vmem:[#allocation7 + $0xc] sm:$0xf]
    %v268 = vld [vmem:[#allocation7 + $0x10] sm:$0xf]
    %v269 = vld [vmem:[#allocation7 + $0x14] sm:$0xf]
    %v270 = vld [vmem:[#allocation7 + $0x18] sm:$0xf]
    %v271 = vld [vmem:[#allocation7 + $0x1c] sm:$0xf]
    %v272 = vld [vmem:[#allocation7 + $0x20] sm:$0xf]
    %v273 = vld [vmem:[#allocation7 + $0x24] sm:$0xf]
    %v274 = vld [vmem:[#allocation7 + $0x28] sm:$0xf]
    %v275 = vld [vmem:[#allocation7 + $0x2c] sm:$0xf]
    %v276 = vld [vmem:[#allocation7 + $0x30] sm:$0xf]
    %v277 = vld [vmem:[#allocation7 + $0x34] sm:$0xf]
    %v278 = vld [vmem:[#allocation7 + $0x38] sm:$0xf]
    %v279 = vld [vmem:[#allocation7 + $0x3c] sm:$0xf]
    %v280 = vld [vmem:[%s4] sm:$0x1]
    %v282 = vlaneseq
    %v283 = vshrl.u32 %v282, 7
    %v284 = vsub.s32 0, %v283
    %v285 = vrot.slane %v280, %v284
    %v303 = vunpack.c.l.b16 %v264
    %v304 = vunpack.c.l.b16 %v265
    %v305 = vunpack.c.l.b16 %v266
    %v306 = vunpack.c.l.b16 %v267
    %v307 = vunpack.c.l.b16 %v268
    %v308 = vunpack.c.l.b16 %v269
    %v309 = vunpack.c.l.b16 %v270
    %v310 = vunpack.c.l.b16 %v271
    %v311 = vunpack.c.l.b16 %v272
    %v312 = vunpack.c.l.b16 %v273
    %v313 = vunpack.c.l.b16 %v274
    %v314 = vunpack.c.l.b16 %v275
    %v315 = vunpack.c.l.b16 %v276
    %v316 = vunpack.c.l.b16 %v277
    %v317 = vunpack.c.l.b16 %v278
    %v318 = vunpack.c.l.b16 %v279
    %v319 = vpack.c.b16 %v304, %v303
    %v320 = vpack.c.b16 %v306, %v305
    %v321 = vpack.c.b16 %v308, %v307
    %v322 = vpack.c.b16 %v310, %v309
    %v323 = vpack.c.b16 %v312, %v311
    %v324 = vpack.c.b16 %v314, %v313
    %v325 = vpack.c.b16 %v316, %v315
    %v326 = vpack.c.b16 %v318, %v317
    %335 = vmatprep.subr.bf16.mxu0 0
    %336 = vmatpush1.bf16.msra.mxu0 %v319
    %337 = vmatprep.subr.bf16.mxu0 0
    %338 = vmatpush1.bf16.msra.mxu0 %v320
    %339 = vmatprep.subr.bf16.mxu0 0
    %340 = vmatpush1.bf16.msra.mxu0 %v321
    %341 = vmatprep.subr.bf16.mxu0 0
    %342 = vmatpush1.bf16.msra.mxu0 %v322
    %343 = vmatprep.subr.bf16.mxu0 0
    %344 = vmatpush1.bf16.msra.mxu0 %v323
    %345 = vmatprep.subr.bf16.mxu0 0
    %346 = vmatpush1.bf16.msra.mxu0 %v324
    %347 = vmatprep.subr.bf16.mxu0 0
    %348 = vmatpush1.bf16.msra.mxu0 %v325
    %349 = vmatprep.subr.bf16.mxu0 0
    %350 = vmatpush1.bf16.msra.mxu0 %v326
    %351 = vmatprep.subr.bf16.mxu0 0
    %352 = vmatpush1.bf16.msra.mxu0 0
    %353 = vmatprep.subr.bf16.mxu0 0
    %354 = vmatpush1.bf16.msra.mxu0 0
    %355 = vmatprep.subr.bf16.mxu0 0
    %356 = vmatpush1.bf16.msra.mxu0 0
    %357 = vmatprep.subr.bf16.mxu0 0
    %358 = vmatpush1.bf16.msra.mxu0 0
    %359 = vmatprep.subr.bf16.mxu0 0
    %360 = vmatpush1.bf16.msra.mxu0 0
    %361 = vmatprep.subr.bf16.mxu0 0
    %362 = vmatpush1.bf16.msra.mxu0 0
    %363 = vmatprep.subr.bf16.mxu0 0
    %364 = vmatpush1.bf16.msra.mxu0 0
    %365 = vmatprep.subr.bf16.mxu0 0
    %366 = vmatpush1.bf16.msra.mxu0 0
    %367 = vmatprep.mubr.bf16.mxu0 0
    %368 = vmatmul.mubr.bf16.gmra.mrb[0].mxu0 %v263
    %v369 = vpop.f32.mrb[0].mxu0
    %v370 = vadd.f32 %v285, %v369
    %v371 = vpop.f32.mrb[0].mxu0
    %v372 = vpop.f32.mrb[0].mxu0
    %v373 = vpop.f32.mrb[0].mxu0
    %374 = vdwg.mxu0
    %v375 = vmax.f32 %v370, 0.0
    %376 = vst [vmem:[#allocation8] sm:$0x3] %v375
    // Predicated region
    $region34: #{tpu_custom_call.1} parent=1 // pred_check
      _
    $region35: #{tpu_custom_call.1} parent=1 // pred_check_branch
      %378 = sbr.rel (0) target = $region37
    $region36: #{tpu_custom_call.1} parent=1 // pred_region
      %s380 = ssub.s32 32, 32
      %381 = vsyncadd [#allocation4], %s380
      %s383 = sshll.u32 [#allocation8], 4
      %s384 = int_to_ptr.vmem [resolvable:$true] %s383
      %386 = dma.vmem_to_hbm [thread:$0]  %s384, 32, %s5, [#allocation4]
    $region37: #{tpu_custom_call.1} parent=1 // pred_fallthru
      _
    // Predicated region
    $region38: #{tpu_custom_call.1} parent=1 // pred_check
      _
    $region39: #{tpu_custom_call.1} parent=1 // pred_check_branch
      %388 = sbr.rel (0) target = $region41
    $region40: #{tpu_custom_call.1} parent=1 // pred_region
      %389 = dma.done [#allocation4], 32
    $region41: #{tpu_custom_call.1} parent=1 // pred_fallthru
      _
    %390 = vsyncpa [#allocation3], 1
    %391 = vsyncpa [#allocation6], 1
    %392 = vsyncpa [#allocation4], 1

</llo_original>
